<compile_context>
chip_gen: v7x
topology: tpu7x:2x2x1
jax: 0.10.0
libtpu: 0.0.40
codegen_flags: <defaults>
</compile_context>

<pallas_src>
import functools

import jax
import jax.numpy as jnp
import numpy as np
from jax.experimental import pallas as pl
from jax.experimental.pallas import tpu as pltpu


def _sfc_loss_kernel(x_ref, lab_ref, cc_ref, oc_ref, ow_ref, out_ref, *,
                     batch_size, close_numclasses, feat_dim, block_cols):
    i = pl.program_id(0)

    x = x_ref[...]                                  # (D, TB) f32, batch on lanes
    lab = lab_ref[...]                              # (2, TB) i32
    cls = lab[0:1, :]                               # (1, TB) class id
    syn = lab[1:2, :]                               # (1, TB) synthetic flag
    ow = ow_ref[0, 0]                               # scalar sigmoid(out_weight)

    tb = x.shape[1]
    C = close_numclasses
    D = feat_dim

    # --- gather the label's close center: unrolled VPU select from SMEM -----
    # Per-class lane masks are computed once and reused for every feature dim.
    g = [jnp.zeros((1, tb), jnp.float32) for _ in range(D)]
    for c in range(C):
        m = cls == c
        for d in range(D):
            g[d] = jnp.where(m, cc_ref[c, d], g[d])

    # mixing weight: 0 for real rows, sigmoid(out_weight) for synthetic rows
    w = jnp.where(syn == 1, ow, jnp.float32(0.0))   # (1, TB)

    # --- single selected-center squared distance -----------------------------
    acc = jnp.zeros((1, tb), jnp.float32)
    for d in range(D):
        sel = (1.0 - w) * g[d] + w * oc_ref[0, d]   # selected (close or mid) center
        diff = x[d:d + 1, :] - sel
        acc = acc + diff * diff                     # (1, TB)

    # clamp-before-sum semantics of the reference: the selected column is
    # clamped to [1e-12, 1e12]; the other (C-1) masked-out columns each add
    # 1e-12.  Out-of-range class ids (all-zero mask) reduce to C * 1e-12.
    valid = jnp.logical_and(cls >= 0, cls < C).astype(jnp.float32)
    pad_terms = jnp.float32((C - 1) * 1e-12)
    dist = jnp.clip(valid * acc, 1e-12, 1e12) + pad_terms

    # mask lanes past the real batch (partial final block); select ensures any
    # garbage in the padded region can never propagate (even NaNs).
    lane = jax.lax.broadcasted_iota(jnp.int32, (1, tb), 1) + i * block_cols
    dist = jnp.where(lane < batch_size, dist, 0.0)

    psum = jnp.sum(dist, axis=1, keepdims=True)     # (1, 1) lane reduce
    out_ref[0] = jnp.broadcast_to(psum, (1, 128))   # lane-dense partial


def _choose_batch_tile(B, block_rows):
    """Lane-axis tile: multiple of 128 (or the full batch); >=2 blocks for big B."""
    block_rows = max(128, (int(block_rows) // 128) * 128)
    if B <= block_rows:
        if B >= 512:
            # prefer >= 2 grid steps so both v7x TensorCores get work
            half = ((-(-B // 2)) + 127) // 128 * 128
            if half < B:
                return half, -(-B // half)
        return B, 1
    return block_rows, -(-B // block_rows)


def sfc_loss(x, labels, close_centers, open_centers, out_weight,
             num_classes=10, block_rows=32768):
    """Pallas implementation of SFCloss.forward.

    x:             (B, feat_dim) float32
    labels:        (B, 2) int32   -- [:,0] = class id, [:,1] = synthetic flag {0,1}
    close_centers: (num_classes-1, feat_dim) float32
    open_centers:  (1, feat_dim) float32
    out_weight:    (1,) float32
    """
    x = x.astype(jnp.float32)
    labels = labels.astype(jnp.int32)
    B, D = x.shape
    C = num_classes - 1

    # batch-on-lanes layout (tiny wrapper transposes; D is 2 for this model)
    x_t = jnp.transpose(x)                                  # (D, B)
    lab_t = jnp.transpose(labels)                           # (2, B)

    # tiny parameter tensors -> SMEM scalars
    cc = close_centers.astype(jnp.float32).reshape(C, D)    # (C, D)
    oc = open_centers.astype(jnp.float32).reshape(1, D)     # (1, D)
    sig_ow = jax.nn.sigmoid(out_weight.astype(jnp.float32)).reshape(1, 1)

    tb, nb = _choose_batch_tile(B, block_rows)

    kernel = functools.partial(_sfc_loss_kernel, batch_size=B,
                               close_numclasses=C, feat_dim=D, block_cols=tb)

    partials = pl.pallas_call(
        kernel,
        out_shape=jax.ShapeDtypeStruct((nb, 1, 128), jnp.float32),
        grid=(nb,),
        in_specs=[
            pl.BlockSpec((D, tb), lambda i: (0, i)),             # x tile (lanes = batch)
            pl.BlockSpec((2, tb), lambda i: (0, i)),             # labels tile
            pl.BlockSpec((C, D), lambda i: (0, 0),
                         memory_space=pltpu.MemorySpace.SMEM),   # close centers
            pl.BlockSpec((1, D), lambda i: (0, 0),
                         memory_space=pltpu.MemorySpace.SMEM),   # open center
            pl.BlockSpec((1, 1), lambda i: (0, 0),
                         memory_space=pltpu.MemorySpace.SMEM),   # sigmoid(out_weight)
        ],
        out_specs=pl.BlockSpec((1, 1, 128), lambda i: (i, 0, 0)),
        compiler_params=pltpu.CompilerParams(
            dimension_semantics=("parallel",)),
    )(x_t, lab_t, cc, oc, sig_ow)

    # tiny final reduction over per-block partial sums
    return jnp.sum(partials[:, 0, 0]) / jnp.float32(B)


def sfc_loss_ref(x, labels, close_centers, open_centers, out_weight,
                 num_classes=10):
    """Pure-JAX reference mirroring the PyTorch forward."""
    C = num_classes - 1
    B = x.shape[0]
    labels_class = labels[:, 0]
    x2 = jnp.sum(x ** 2, axis=1, keepdims=True)
    c2 = jnp.sum(close_centers ** 2, axis=1)
    xc = jnp.dot(x, close_centers.T, precision=jax.lax.Precision.HIGHEST)
    distmat_close = x2 + c2[None, :] - 2.0 * xc
    ow = jax.nn.sigmoid(out_weight)
    mid = (1.0 - ow) * close_centers + ow * open_centers
    m2 = jnp.sum(mid ** 2, axis=1)
    xm = jnp.dot(x, mid.T, precision=jax.lax.Precision.HIGHEST)
    distmat_open = x2 + m2[None, :] - 2.0 * xm
    classes = jnp.arange(C)
    mask = (labels_class[:, None] == classes[None, :]).astype(jnp.float32)
    dist_close = jnp.sum(jnp.clip(distmat_close * mask, 1e-12, 1e12), axis=1)
    dist_open = jnp.sum(jnp.clip(distmat_open * mask, 1e-12, 1e12), axis=1)
    syn = (labels[:, 1] == 1).astype(jnp.float32)
    dist = dist_close * (1.0 - syn) + syn * dist_open
    return jnp.sum(dist) / B


if __name__ == "__main__":
    num_classes, feat_dim = 10, 2

    key = jax.random.PRNGKey(0)
    k1, k2 = jax.random.split(key, 2)

    # deterministic synthetic parameters (shapes from SFCloss.__init__)
    close_centers = jax.random.normal(k1, (num_classes - 1, feat_dim), jnp.float32)
    open_centers = jax.random.normal(k2, (1, feat_dim), jnp.float32)
    out_weight = jnp.zeros((1,), jnp.float32)

    # (batch, block_rows): single-block, odd small batch, forced 2-block split
    # (>=512 path, partial last block), and an explicit multi-block grid.
    cases = ((8, 32768), (37, 32768), (600, 32768), (1536, 512))
    for B, block_rows in cases:
        kx, kc, ks = jax.random.split(jax.random.fold_in(key, B), 3)
        x = jax.random.normal(kx, (B, feat_dim), jnp.float32)
        labels_cls = jax.random.randint(kc, (B,), 0, num_classes - 1)
        labels_syn = jax.random.randint(ks, (B,), 0, 2)
        labels = jnp.stack([labels_cls, labels_syn], axis=1).astype(jnp.int32)

        loss = sfc_loss(x, labels, close_centers, open_centers, out_weight,
                        num_classes=num_classes, block_rows=block_rows)
        jax.block_until_ready(loss)

        loss_ref = sfc_loss_ref(x, labels, close_centers, open_centers,
                                out_weight, num_classes=num_classes)
        np.testing.assert_allclose(np.asarray(loss), np.asarray(loss_ref),
                                   rtol=1e-3, atol=1e-5)

    print("KERNEL_OK")
</pallas_src>

<mosaic_0001>
module attributes {stable_mosaic.version = 11 : i64} {
  func.func @_sfc_loss_kernel(%arg0: i32, %arg1: memref<2x8xf32, #tpu.memory_space<vmem>>, %arg2: memref<2x8xi32, #tpu.memory_space<vmem>>, %arg3: memref<9x2xf32, #tpu.memory_space<smem>>, %arg4: memref<1x2xf32, #tpu.memory_space<smem>>, %arg5: memref<1x1xf32, #tpu.memory_space<smem>>, %arg6: memref<1x1x128xf32, #tpu.memory_space<vmem>>) attributes {dimension_semantics = [#tpu.dimension_semantics<parallel>], iteration_bounds = array<i64: 1>, scalar_prefetch = 0 : i64, scratch_operands = 0 : i64, tpu.core_type = #tpu.core_type<tc>, window_params = [{transform_indices = @transform_0, window_bounds = array<i64: 2, 8>}, {transform_indices = @transform_1, window_bounds = array<i64: 2, 8>}, {transform_indices = @transform_2, window_bounds = array<i64: 9, 2>}, {transform_indices = @transform_3, window_bounds = array<i64: 1, 2>}, {transform_indices = @transform_4, window_bounds = array<i64: 1, 1>}, {transform_indices = @transform_5, window_bounds = array<i64: 1, 1, 128>}]} {
    %c0 = arith.constant 0 : index
    %c0_0 = arith.constant 0 : index
    %0 = vector.load %arg1[%c0, %c0_0] : memref<2x8xf32, #tpu.memory_space<vmem>>, vector<2x8xf32>
    %c0_1 = arith.constant 0 : index
    %c0_2 = arith.constant 0 : index
    %1 = vector.load %arg2[%c0_1, %c0_2] : memref<2x8xi32, #tpu.memory_space<vmem>>, vector<2x8xi32>
    %2 = vector.extract_strided_slice %1 {offsets = [0, 0], sizes = [1, 8], strides = [1, 1]} : vector<2x8xi32> to vector<1x8xi32>
    %3 = vector.extract_strided_slice %1 {offsets = [1, 0], sizes = [1, 8], strides = [1, 1]} : vector<2x8xi32> to vector<1x8xi32>
    %c0_3 = arith.constant 0 : index
    %c0_4 = arith.constant 0 : index
    %4 = memref.load %arg5[%c0_3, %c0_4] : memref<1x1xf32, #tpu.memory_space<smem>>
    %cst = arith.constant 0.000000e+00 : f32
    %5 = vector.broadcast %cst : f32 to vector<1x8xf32>
    %cst_5 = arith.constant 0.000000e+00 : f32
    %6 = vector.broadcast %cst_5 : f32 to vector<1x8xf32>
    %c0_i32 = arith.constant 0 : i32
    %7 = vector.broadcast %c0_i32 : i32 to vector<1x8xi32>
    %8 = arith.cmpi eq, %2, %7 : vector<1x8xi32>
    %c0_6 = arith.constant 0 : index
    %c0_7 = arith.constant 0 : index
    %9 = memref.load %arg3[%c0_6, %c0_7] : memref<9x2xf32, #tpu.memory_space<smem>>
    %10 = vector.broadcast %9 : f32 to vector<1x8xf32>
    %11 = arith.select %8, %10, %5 : vector<1x8xi1>, vector<1x8xf32>
    %c0_8 = arith.constant 0 : index
    %c1 = arith.constant 1 : index
    %12 = memref.load %arg3[%c0_8, %c1] : memref<9x2xf32, #tpu.memory_space<smem>>
    %13 = vector.broadcast %12 : f32 to vector<1x8xf32>
    %14 = arith.select %8, %13, %6 : vector<1x8xi1>, vector<1x8xf32>
    %c1_i32 = arith.constant 1 : i32
    %15 = vector.broadcast %c1_i32 : i32 to vector<1x8xi32>
    %16 = arith.cmpi eq, %2, %15 : vector<1x8xi32>
    %c1_9 = arith.constant 1 : index
    %c0_10 = arith.constant 0 : index
    %17 = memref.load %arg3[%c1_9, %c0_10] : memref<9x2xf32, #tpu.memory_space<smem>>
    %18 = vector.broadcast %17 : f32 to vector<1x8xf32>
    %19 = arith.select %16, %18, %11 : vector<1x8xi1>, vector<1x8xf32>
    %c1_11 = arith.constant 1 : index
    %c1_12 = arith.constant 1 : index
    %20 = memref.load %arg3[%c1_11, %c1_12] : memref<9x2xf32, #tpu.memory_space<smem>>
    %21 = vector.broadcast %20 : f32 to vector<1x8xf32>
    %22 = arith.select %16, %21, %14 : vector<1x8xi1>, vector<1x8xf32>
    %c2_i32 = arith.constant 2 : i32
    %23 = vector.broadcast %c2_i32 : i32 to vector<1x8xi32>
    %24 = arith.cmpi eq, %2, %23 : vector<1x8xi32>
    %c2 = arith.constant 2 : index
    %c0_13 = arith.constant 0 : index
    %25 = memref.load %arg3[%c2, %c0_13] : memref<9x2xf32, #tpu.memory_space<smem>>
    %26 = vector.broadcast %25 : f32 to vector<1x8xf32>
    %27 = arith.select %24, %26, %19 : vector<1x8xi1>, vector<1x8xf32>
    %c2_14 = arith.constant 2 : index
    %c1_15 = arith.constant 1 : index
    %28 = memref.load %arg3[%c2_14, %c1_15] : memref<9x2xf32, #tpu.memory_space<smem>>
    %29 = vector.broadcast %28 : f32 to vector<1x8xf32>
    %30 = arith.select %24, %29, %22 : vector<1x8xi1>, vector<1x8xf32>
    %c3_i32 = arith.constant 3 : i32
    %31 = vector.broadcast %c3_i32 : i32 to vector<1x8xi32>
    %32 = arith.cmpi eq, %2, %31 : vector<1x8xi32>
    %c3 = arith.constant 3 : index
    %c0_16 = arith.constant 0 : index
    %33 = memref.load %arg3[%c3, %c0_16] : memref<9x2xf32, #tpu.memory_space<smem>>
    %34 = vector.broadcast %33 : f32 to vector<1x8xf32>
    %35 = arith.select %32, %34, %27 : vector<1x8xi1>, vector<1x8xf32>
    %c3_17 = arith.constant 3 : index
    %c1_18 = arith.constant 1 : index
    %36 = memref.load %arg3[%c3_17, %c1_18] : memref<9x2xf32, #tpu.memory_space<smem>>
    %37 = vector.broadcast %36 : f32 to vector<1x8xf32>
    %38 = arith.select %32, %37, %30 : vector<1x8xi1>, vector<1x8xf32>
    %c4_i32 = arith.constant 4 : i32
    %39 = vector.broadcast %c4_i32 : i32 to vector<1x8xi32>
    %40 = arith.cmpi eq, %2, %39 : vector<1x8xi32>
    %c4 = arith.constant 4 : index
    %c0_19 = arith.constant 0 : index
    %41 = memref.load %arg3[%c4, %c0_19] : memref<9x2xf32, #tpu.memory_space<smem>>
    %42 = vector.broadcast %41 : f32 to vector<1x8xf32>
    %43 = arith.select %40, %42, %35 : vector<1x8xi1>, vector<1x8xf32>
    %c4_20 = arith.constant 4 : index
    %c1_21 = arith.constant 1 : index
    %44 = memref.load %arg3[%c4_20, %c1_21] : memref<9x2xf32, #tpu.memory_space<smem>>
    %45 = vector.broadcast %44 : f32 to vector<1x8xf32>
    %46 = arith.select %40, %45, %38 : vector<1x8xi1>, vector<1x8xf32>
    %c5_i32 = arith.constant 5 : i32
    %47 = vector.broadcast %c5_i32 : i32 to vector<1x8xi32>
    %48 = arith.cmpi eq, %2, %47 : vector<1x8xi32>
    %c5 = arith.constant 5 : index
    %c0_22 = arith.constant 0 : index
    %49 = memref.load %arg3[%c5, %c0_22] : memref<9x2xf32, #tpu.memory_space<smem>>
    %50 = vector.broadcast %49 : f32 to vector<1x8xf32>
    %51 = arith.select %48, %50, %43 : vector<1x8xi1>, vector<1x8xf32>
    %c5_23 = arith.constant 5 : index
    %c1_24 = arith.constant 1 : index
    %52 = memref.load %arg3[%c5_23, %c1_24] : memref<9x2xf32, #tpu.memory_space<smem>>
    %53 = vector.broadcast %52 : f32 to vector<1x8xf32>
    %54 = arith.select %48, %53, %46 : vector<1x8xi1>, vector<1x8xf32>
    %c6_i32 = arith.constant 6 : i32
    %55 = vector.broadcast %c6_i32 : i32 to vector<1x8xi32>
    %56 = arith.cmpi eq, %2, %55 : vector<1x8xi32>
    %c6 = arith.constant 6 : index
    %c0_25 = arith.constant 0 : index
    %57 = memref.load %arg3[%c6, %c0_25] : memref<9x2xf32, #tpu.memory_space<smem>>
    %58 = vector.broadcast %57 : f32 to vector<1x8xf32>
    %59 = arith.select %56, %58, %51 : vector<1x8xi1>, vector<1x8xf32>
    %c6_26 = arith.constant 6 : index
    %c1_27 = arith.constant 1 : index
    %60 = memref.load %arg3[%c6_26, %c1_27] : memref<9x2xf32, #tpu.memory_space<smem>>
    %61 = vector.broadcast %60 : f32 to vector<1x8xf32>
    %62 = arith.select %56, %61, %54 : vector<1x8xi1>, vector<1x8xf32>
    %c7_i32 = arith.constant 7 : i32
    %63 = vector.broadcast %c7_i32 : i32 to vector<1x8xi32>
    %64 = arith.cmpi eq, %2, %63 : vector<1x8xi32>
    %c7 = arith.constant 7 : index
    %c0_28 = arith.constant 0 : index
    %65 = memref.load %arg3[%c7, %c0_28] : memref<9x2xf32, #tpu.memory_space<smem>>
    %66 = vector.broadcast %65 : f32 to vector<1x8xf32>
    %67 = arith.select %64, %66, %59 : vector<1x8xi1>, vector<1x8xf32>
    %c7_29 = arith.constant 7 : index
    %c1_30 = arith.constant 1 : index
    %68 = memref.load %arg3[%c7_29, %c1_30] : memref<9x2xf32, #tpu.memory_space<smem>>
    %69 = vector.broadcast %68 : f32 to vector<1x8xf32>
    %70 = arith.select %64, %69, %62 : vector<1x8xi1>, vector<1x8xf32>
    %c8_i32 = arith.constant 8 : i32
    %71 = vector.broadcast %c8_i32 : i32 to vector<1x8xi32>
    %72 = arith.cmpi eq, %2, %71 : vector<1x8xi32>
    %c8 = arith.constant 8 : index
    %c0_31 = arith.constant 0 : index
    %73 = memref.load %arg3[%c8, %c0_31] : memref<9x2xf32, #tpu.memory_space<smem>>
    %74 = vector.broadcast %73 : f32 to vector<1x8xf32>
    %75 = arith.select %72, %74, %67 : vector<1x8xi1>, vector<1x8xf32>
    %c8_32 = arith.constant 8 : index
    %c1_33 = arith.constant 1 : index
    %76 = memref.load %arg3[%c8_32, %c1_33] : memref<9x2xf32, #tpu.memory_space<smem>>
    %77 = vector.broadcast %76 : f32 to vector<1x8xf32>
    %78 = arith.select %72, %77, %70 : vector<1x8xi1>, vector<1x8xf32>
    %c1_i32_34 = arith.constant 1 : i32
    %79 = vector.broadcast %c1_i32_34 : i32 to vector<1x8xi32>
    %80 = arith.cmpi eq, %3, %79 : vector<1x8xi32>
    %cst_35 = arith.constant 0.000000e+00 : f32
    %81 = vector.broadcast %4 : f32 to vector<1x8xf32>
    %82 = vector.broadcast %cst_35 : f32 to vector<1x8xf32>
    %83 = arith.select %80, %81, %82 : vector<1x8xi1>, vector<1x8xf32>
    %cst_36 = arith.constant 0.000000e+00 : f32
    %84 = vector.broadcast %cst_36 : f32 to vector<1x8xf32>
    %cst_37 = arith.constant 1.000000e+00 : f32
    %85 = vector.broadcast %cst_37 : f32 to vector<1x8xf32>
    %86 = arith.subf %85, %83 : vector<1x8xf32>
    %87 = arith.mulf %86, %75 : vector<1x8xf32>
    %c0_38 = arith.constant 0 : index
    %c0_39 = arith.constant 0 : index
    %88 = memref.load %arg4[%c0_38, %c0_39] : memref<1x2xf32, #tpu.memory_space<smem>>
    %89 = vector.broadcast %88 : f32 to vector<1x8xf32>
    %90 = arith.mulf %83, %89 : vector<1x8xf32>
    %91 = arith.addf %87, %90 : vector<1x8xf32>
    %92 = vector.extract_strided_slice %0 {offsets = [0, 0], sizes = [1, 8], strides = [1, 1]} : vector<2x8xf32> to vector<1x8xf32>
    %93 = arith.subf %92, %91 : vector<1x8xf32>
    %94 = arith.mulf %93, %93 : vector<1x8xf32>
    %95 = arith.addf %84, %94 : vector<1x8xf32>
    %cst_40 = arith.constant 1.000000e+00 : f32
    %96 = vector.broadcast %cst_40 : f32 to vector<1x8xf32>
    %97 = arith.subf %96, %83 : vector<1x8xf32>
    %98 = arith.mulf %97, %78 : vector<1x8xf32>
    %c0_41 = arith.constant 0 : index
    %c1_42 = arith.constant 1 : index
    %99 = memref.load %arg4[%c0_41, %c1_42] : memref<1x2xf32, #tpu.memory_space<smem>>
    %100 = vector.broadcast %99 : f32 to vector<1x8xf32>
    %101 = arith.mulf %83, %100 : vector<1x8xf32>
    %102 = arith.addf %98, %101 : vector<1x8xf32>
    %103 = vector.extract_strided_slice %0 {offsets = [1, 0], sizes = [1, 8], strides = [1, 1]} : vector<2x8xf32> to vector<1x8xf32>
    %104 = arith.subf %103, %102 : vector<1x8xf32>
    %105 = arith.mulf %104, %104 : vector<1x8xf32>
    %106 = arith.addf %95, %105 : vector<1x8xf32>
    %c0_i32_43 = arith.constant 0 : i32
    %107 = vector.broadcast %c0_i32_43 : i32 to vector<1x8xi32>
    %108 = arith.cmpi sge, %2, %107 : vector<1x8xi32>
    %c9_i32 = arith.constant 9 : i32
    %109 = vector.broadcast %c9_i32 : i32 to vector<1x8xi32>
    %110 = arith.cmpi slt, %2, %109 : vector<1x8xi32>
    %111 = arith.andi %108, %110 : vector<1x8xi1>
    %112 = arith.extui %111 : vector<1x8xi1> to vector<1x8xi32>
    %113 = arith.sitofp %112 : vector<1x8xi32> to vector<1x8xf32>
    %114 = arith.mulf %113, %106 : vector<1x8xf32>
    %cst_44 = arith.constant 9.99999996E-13 : f32
    %cst_45 = arith.constant 9.99999995E+11 : f32
    %115 = vector.broadcast %cst_44 : f32 to vector<1x8xf32>
    %116 = arith.maximumf %115, %114 : vector<1x8xf32>
    %117 = vector.broadcast %cst_45 : f32 to vector<1x8xf32>
    %118 = arith.minimumf %117, %116 : vector<1x8xf32>
    %cst_46 = arith.constant 8.000000e-12 : f32
    %119 = vector.broadcast %cst_46 : f32 to vector<1x8xf32>
    %120 = arith.addf %118, %119 : vector<1x8xf32>
    %121 = tpu.iota {dimensions = array<i32: 1>} : vector<1x8xi32>
    %c8_i32_47 = arith.constant 8 : i32
    %122 = arith.muli %arg0, %c8_i32_47 : i32
    %123 = vector.broadcast %122 : i32 to vector<1x8xi32>
    %124 = arith.addi %121, %123 : vector<1x8xi32>
    %c8_i32_48 = arith.constant 8 : i32
    %125 = vector.broadcast %c8_i32_48 : i32 to vector<1x8xi32>
    %126 = arith.cmpi slt, %124, %125 : vector<1x8xi32>
    %cst_49 = arith.constant 0.000000e+00 : f32
    %127 = vector.broadcast %cst_49 : f32 to vector<1x8xf32>
    %128 = arith.select %126, %120, %127 : vector<1x8xi1>, vector<1x8xf32>
    %cst_50 = arith.constant dense<0.000000e+00> : vector<1xf32>
    %129 = vector.multi_reduction <add>, %128, %cst_50 [1] : vector<1x8xf32> to vector<1xf32>
    %130 = vector.shape_cast %129 : vector<1xf32> to vector<1x1xf32>
    %131 = vector.shape_cast %130 : vector<1x1xf32> to vector<1x1xf32>
    %132 = vector.broadcast %131 : vector<1x1xf32> to vector<1x128xf32>
    %c0_51 = arith.constant 0 : index
    %c0_52 = arith.constant 0 : index
    %c0_53 = arith.constant 0 : index
    %133 = vector.load %arg6[%c0_51, %c0_52, %c0_53] : memref<1x1x128xf32, #tpu.memory_space<vmem>>, vector<1x1x128xf32>
    %134 = vector.shape_cast %133 : vector<1x1x128xf32> to vector<1x128xf32>
    %135 = vector.shape_cast %132 : vector<1x128xf32> to vector<1x1x128xf32>
    tpu.vector_store %arg6[%c0_51, %c0_52, %c0_53], %135 {strides = array<i32>} : memref<1x1x128xf32, #tpu.memory_space<vmem>>, vector<1x1x128xf32>,
    return
  }
  func.func @transform_0(%arg0: i32) -> (i32, i32) {
    %c0_i32 = arith.constant 0 : i32
    %c0_i32_0 = arith.constant 0 : i32
    return %c0_i32, %arg0 : i32, i32
  }
  func.func @transform_1(%arg0: i32) -> (i32, i32) {
    %c0_i32 = arith.constant 0 : i32
    %c0_i32_0 = arith.constant 0 : i32
    return %c0_i32, %arg0 : i32, i32
  }
  func.func @transform_2(%arg0: i32) -> (i32, i32) {
    %c0_i32 = arith.constant 0 : i32
    %c0_i32_0 = arith.constant 0 : i32
    %c0_i32_1 = arith.constant 0 : i32
    return %c0_i32, %c0_i32_0 : i32, i32
  }
  func.func @transform_3(%arg0: i32) -> (i32, i32) {
    %c0_i32 = arith.constant 0 : i32
    %c0_i32_0 = arith.constant 0 : i32
    %c0_i32_1 = arith.constant 0 : i32
    return %c0_i32, %c0_i32_0 : i32, i32
  }
  func.func @transform_4(%arg0: i32) -> (i32, i32) {
    %c0_i32 = arith.constant 0 : i32
    %c0_i32_0 = arith.constant 0 : i32
    %c0_i32_1 = arith.constant 0 : i32
    return %c0_i32, %c0_i32_0 : i32, i32
  }
  func.func @transform_5(%arg0: i32) -> (i32, i32, i32) {
    %c0_i32 = arith.constant 0 : i32
    %c0_i32_0 = arith.constant 0 : i32
    %c0_i32_1 = arith.constant 0 : i32
    return %arg0, %c0_i32, %c0_i32_0 : i32, i32, i32
  }
}

</mosaic_0001>

<llo_original>
// kernel: tpu_custom_call.1
$region0: #{tpu_custom_call.1}
  #allocation0 [shape = 'u32[]', space=smem, size = 0x4, offset = 0x4, fixed_abs, tag = 'smem constant byte address 0x4 - core index']
  #allocation1 [shape = 'u32[144,128]{1,0:T(1,128)}', space=vmem, size = 0x12000, scoped, tag = 'internal scratch']
  #allocation2 [shape = 'f32[1,1]{1,0:T(1,128)S(6)}', space=smem, size = 0x200, scoped, tag = 'scoped memory for tpu_custom_call.1']
  %s0 = inlined_call_operand.vmem [shape: f32[2,8], index: 0, kind: input, shape index: {}]
  %s1 = inlined_call_operand.vmem [shape: s32[2,8], index: 1, kind: input, shape index: {}]
  %s2 = inlined_call_operand.vmem [shape: f32[9,2], index: 2, kind: input, shape index: {}]
  %s3 = inlined_call_operand.vmem [shape: f32[1,2], index: 3, kind: input, shape index: {}]
  %s4 = inlined_call_operand.<no memory space> [shape: f32[1,1], index: 4, kind: input, shape index: {}]
  %s5 = inlined_call_operand.hbm [shape: f32[1,1,128], index: 5, kind: output, shape index: {}]
  %s6 = sld [smem:[#allocation0]]
  $region38: #{tpu_custom_call.1} parent=0
    _
  %s8 = ssub.s32 1, %s6
  %s9 = scalar_select 0, %s8, %s6
  %10 = sst [smem:[#allocation2]] %s4
  $region1: #{tpu_custom_call.1} parent=0
    #allocation3 [shape = 'u8[8192]{0}', space=smem, size = 0x2000, scoped, tag = 'input window, operand 2, single buffered']
    #allocation4 [shape = 's32[1]{0}', space=sflag, size = 0x4, scoped, tag = 'scoped memory for tpu_custom_call.1']
    #allocation5 [shape = 's32[1]{0}', space=sflag, size = 0x4, scoped, tag = 'scoped memory for tpu_custom_call.1']
    #allocation6 [shape = 'u8[512]{0}', space=smem, size = 0x200, scoped, tag = 'input window, operand 3, single buffered']
    #allocation7 [shape = 's32[1]{0}', space=sflag, size = 0x4, scoped, tag = 'scoped memory for tpu_custom_call.1']
    #allocation8 [shape = 'u8[512]{0}', space=vmem, size = 0x400, scoped, tag = 'output window, operand 0, single buffered']
    %11 = vsyncpa [#allocation5], 0
    %12 = vsyncpa [#allocation7], 0
    %13 = vsyncpa [#allocation4], 0
    // Predicated region
    $region2: #{tpu_custom_call.1} parent=1 // pred_check
      _
    $region3: #{tpu_custom_call.1} parent=1 // pred_check_branch
      %15 = sbr.rel (0) target = $region5
    $region4: #{tpu_custom_call.1} parent=1 // pred_region
      _
    $region5: #{tpu_custom_call.1} parent=1 // pred_fallthru
      _
    // Predicated region
    $region6: #{tpu_custom_call.1} parent=1 // pred_check
      _
    $region7: #{tpu_custom_call.1} parent=1 // pred_check_branch
      %17 = sbr.rel (0) target = $region9
    $region8: #{tpu_custom_call.1} parent=1 // pred_region
      _
    $region9: #{tpu_custom_call.1} parent=1 // pred_fallthru
      _
    // Predicated region
    $region10: #{tpu_custom_call.1} parent=1 // pred_check
      _
    $region11: #{tpu_custom_call.1} parent=1 // pred_check_branch
      %19 = sbr.rel (0) target = $region13
    $region12: #{tpu_custom_call.1} parent=1 // pred_region
      %s21 = ssub.s32 256, 256
      %22 = vsyncadd [#allocation5], %s21
      %s23 = sshll.u32 %s2, 4
      %s24 = int_to_ptr.vmem [resolvable:$true] %s23
      %29 = dma.vmem_to_smem %s24, 256, [#allocation3], [#allocation5], 128, 128, 8
    $region13: #{tpu_custom_call.1} parent=1 // pred_fallthru
      _
    // Predicated region
    $region14: #{tpu_custom_call.1} parent=1 // pred_check
      _
    $region15: #{tpu_custom_call.1} parent=1 // pred_check_branch
      %31 = sbr.rel (0) target = $region17
    $region16: #{tpu_custom_call.1} parent=1 // pred_region
      %s33 = ssub.s32 16, 16
      %34 = vsyncadd [#allocation7], %s33
      %s36 = sshll.u32 %s3, 4
      %s37 = int_to_ptr.vmem [resolvable:$true] %s36
      %39 = dma.vmem_to_smem %s37, 16, [#allocation6], [#allocation7]
    $region17: #{tpu_custom_call.1} parent=1 // pred_fallthru
      _
    // Predicated region
    $region18: #{tpu_custom_call.1} parent=1 // pred_check
      _
    $region19: #{tpu_custom_call.1} parent=1 // pred_check_branch
      %41 = sbr.rel (0) target = $region21
    $region20: #{tpu_custom_call.1} parent=1 // pred_region
      _
    $region21: #{tpu_custom_call.1} parent=1 // pred_fallthru
      _
    // Predicated region
    $region22: #{tpu_custom_call.1} parent=1 // pred_check
      _
    $region23: #{tpu_custom_call.1} parent=1 // pred_check_branch
      %43 = sbr.rel (0) target = $region25
    $region24: #{tpu_custom_call.1} parent=1 // pred_region
      %44 = dma.done [#allocation5], 256
    $region25: #{tpu_custom_call.1} parent=1 // pred_fallthru
      _
    // Predicated region
    $region26: #{tpu_custom_call.1} parent=1 // pred_check
      _
    $region27: #{tpu_custom_call.1} parent=1 // pred_check_branch
      %46 = sbr.rel (0) target = $region29
    $region28: #{tpu_custom_call.1} parent=1 // pred_region
      %47 = dma.done [#allocation7], 16
    $region29: #{tpu_custom_call.1} parent=1 // pred_fallthru
      _
    %48 = sfence
    %v49 = vld [vmem:[%s0] sm:$0x3]
    %v50 = vld [vmem:[%s1] sm:$0x3]
    %s51 = sld [smem:[#allocation2]]
    %vm52 = vcmp.eq.s32.totalorder %v50, 0
    %s53 = sld [smem:[#allocation3]]
    %v54 = vstv %s53
    %v55 = vsel %vm52, %v54, 0.0
    %s56 = sld [smem:[#allocation3 + $0x1]]
    %v57 = vstv %s56
    %v58 = vsel %vm52, %v57, 0.0
    %vm59 = vcmp.eq.s32.totalorder %v50, 1
    %s60 = sld [smem:[#allocation3 + $0x80]]
    %v61 = vstv %s60
    %v62 = vsel %vm59, %v61, %v55
    %s63 = sld [smem:[#allocation3 + $0x81]]
    %v64 = vstv %s63
    %v65 = vsel %vm59, %v64, %v58
    %vm66 = vcmp.eq.s32.totalorder %v50, 2
    %s67 = sld [smem:[#allocation3 + $0x100]]
    %v68 = vstv %s67
    %v69 = vsel %vm66, %v68, %v62
    %s70 = sld [smem:[#allocation3 + $0x101]]
    %v71 = vstv %s70
    %v72 = vsel %vm66, %v71, %v65
    %vm73 = vcmp.eq.s32.totalorder %v50, 3
    %s74 = sld [smem:[#allocation3 + $0x180]]
    %v75 = vstv %s74
    %v76 = vsel %vm73, %v75, %v69
    %s77 = sld [smem:[#allocation3 + $0x181]]
    %v78 = vstv %s77
    %v79 = vsel %vm73, %v78, %v72
    %vm80 = vcmp.eq.s32.totalorder %v50, 4
    %s81 = sld [smem:[#allocation3 + $0x200]]
    %v82 = vstv %s81
    %v83 = vsel %vm80, %v82, %v76
    %s84 = sld [smem:[#allocation3 + $0x201]]
    %v85 = vstv %s84
    %v86 = vsel %vm80, %v85, %v79
    %vm87 = vcmp.eq.s32.totalorder %v50, 5
    %s88 = sld [smem:[#allocation3 + $0x280]]
    %v89 = vstv %s88
    %v90 = vsel %vm87, %v89, %v83
    %s91 = sld [smem:[#allocation3 + $0x281]]
    %v92 = vstv %s91
    %v93 = vsel %vm87, %v92, %v86
    %vm94 = vcmp.eq.s32.totalorder %v50, 6
    %s95 = sld [smem:[#allocation3 + $0x300]]
    %v96 = vstv %s95
    %v97 = vsel %vm94, %v96, %v90
    %s98 = sld [smem:[#allocation3 + $0x301]]
    %v99 = vstv %s98
    %v100 = vsel %vm94, %v99, %v93
    %vm101 = vcmp.eq.s32.totalorder %v50, 7
    %s102 = sld [smem:[#allocation3 + $0x380]]
    %v103 = vstv %s102
    %v104 = vsel %vm101, %v103, %v97
    %s105 = sld [smem:[#allocation3 + $0x381]]
    %v106 = vstv %s105
    %v107 = vsel %vm101, %v106, %v100
    %vm108 = vcmp.eq.s32.totalorder %v50, 8
    %s109 = sld [smem:[#allocation3 + $0x400]]
    %v110 = vstv %s109
    %v111 = vsel %vm108, %v110, %v104
    %s112 = sld [smem:[#allocation3 + $0x401]]
    %v113 = vstv %s112
    %v114 = vsel %vm108, %v113, %v107
    %v115 = vstv %s51
    %v116 = vsel %vm59, %v115, 0.0
    %v117 = vsub.f32 1.0, %v116
    %v119 = vrot.slane %v111, 7
    %v121 = vmul.f32 %v117, %v119
    %s122 = sld [smem:[#allocation6]]
    %v123 = vstv %s122
    %v124 = vmul.f32 %v116, %v123
    %v125 = vadd.f32 %v121, %v124
    %v127 = vrot.slane %v125, 1
    %v129 = vsub.f32 %v49, %v127
    %v130 = vmul.f32 %v129, %v129
    %v131 = vadd.f32 %v130, 0.0
    %v133 = vrot.slane %v114, 7
    %v135 = vmul.f32 %v117, %v133
    %s136 = sld [smem:[#allocation6 + $0x1]]
    %v137 = vstv %s136
    %v138 = vmul.f32 %v116, %v137
    %v139 = vadd.f32 %v135, %v138
    %v140 = vsub.f32 %v49, %v139
    %v141 = vmul.f32 %v140, %v140
    %v143 = vrot.slane %v141, 1
    %v145 = vadd.f32 %v131, %v143
    %vm146 = vcmp.ge.s32.totalorder %v50, 0
    %vm147 = vcmp.lt.s32.totalorder %v50, 9
    %vm148 = vmand %vm146, %vm147
    %v149 = vsel %vm148, 1, 0
    %v150 = vcvt.s32.f32 %v149
    %v151 = vmul.f32 %v150, %v145
    %v152 = vmax.f32 %v151, 1e-12
    %v153 = vmin.f32 %v152, 1e+12
    %v154 = vadd.f32 %v153, 8e-12
    %v155 = vlaneseq
    %v156 = vand.u32 %v155, 127
    %s157 = smul.u32 0, 8
    %v158 = vstv %s157
    %v159 = vadd.s32 %v156, %v158
    %vm160 = vcmp.lt.s32.totalorder %v159, 8
    %v161 = vsel %vm160, %v154, 0.0
    %vm162 = vcmask 57344
    %v163 = vsel %vm162, %v161, 0.0
    %164 = vadd.xlane.f32.xlu0 %v163
    %v165 = vpop.xlane.xlu0 %164
    %166 = vst [vmem:[#allocation8] sm:$0x1] %v165
    // Predicated region
    $region30: #{tpu_custom_call.1} parent=1 // pred_check
      _
    $region31: #{tpu_custom_call.1} parent=1 // pred_check_branch
      %168 = sbr.rel (0) target = $region33
    $region32: #{tpu_custom_call.1} parent=1 // pred_region
      %s170 = ssub.s32 16, 16
      %171 = vsyncadd [#allocation4], %s170
      %s173 = sshll.u32 [#allocation8], 4
      %s174 = int_to_ptr.vmem [resolvable:$true] %s173
      %176 = dma.vmem_to_hbm [thread:$0]  %s174, 16, %s5, [#allocation4]
    $region33: #{tpu_custom_call.1} parent=1 // pred_fallthru
      _
    // Predicated region
    $region34: #{tpu_custom_call.1} parent=1 // pred_check
      _
    $region35: #{tpu_custom_call.1} parent=1 // pred_check_branch
      %178 = sbr.rel (0) target = $region37
    $region36: #{tpu_custom_call.1} parent=1 // pred_region
      %179 = dma.done [#allocation4], 16
    $region37: #{tpu_custom_call.1} parent=1 // pred_fallthru
      _
    %180 = vsyncpa [#allocation4], 1
    %181 = vsyncpa [#allocation5], 1
    %182 = vsyncpa [#allocation7], 1

</llo_original>
